<compile_context>
chip_gen: v5e
topology: v5e:2x2
jax: 0.10.0
libtpu: 0.0.40
codegen_flags: <defaults>
</compile_context>

<pallas_src>
import functools

import jax
import jax.numpy as jnp
from jax.experimental import pallas as pl
from jax.experimental.pallas import tpu as pltpu


def _dqn_kernel(x_ref, w1_ref, b1_ref, w2_ref, b2_ref,
                w3_ref, b3_ref, w4_ref, b4_ref, o_ref):
    """Fused forward for one batch tile: 4 matmuls (bf16 in, f32 acc) + ReLUs."""
    x = x_ref[...].astype(jnp.bfloat16)

    h1 = jnp.dot(x, w1_ref[...], preferred_element_type=jnp.float32) + b1_ref[...]
    h1 = jnp.maximum(h1, 0.0).astype(jnp.bfloat16)

    h2 = jnp.dot(h1, w2_ref[...], preferred_element_type=jnp.float32) + b2_ref[...]
    h2 = jnp.maximum(h2, 0.0).astype(jnp.bfloat16)

    h3 = jnp.dot(h2, w3_ref[...], preferred_element_type=jnp.float32) + b3_ref[...]
    h3 = jnp.maximum(h3, 0.0).astype(jnp.bfloat16)

    out = jnp.dot(h3, w4_ref[...], preferred_element_type=jnp.float32) + b4_ref[...]
    o_ref[...] = out.astype(o_ref.dtype)


def _round_up(n, m):
    return ((n + m - 1) // m) * m


def _cdiv(a, b):
    return (a + b - 1) // b


def _num_tensorcores():
    """2 TensorCores per chip on v7x; 1 on v5e/v6e. Fallback: 1."""
    try:
        kind = jax.devices()[0].device_kind.lower()
    except Exception:
        return 1
    return 2 if "v7" in kind else 1


def prepare_params(params):
    """One-time weight preprocessing (call when params are created/updated).

    * stores weights transposed as (in_features, out_features), bf16
    * zero-pads the 64-wide hidden layer to 128 lanes (W3, b3, W4) — math is
      unchanged since padded columns/rows are zero and relu(0) = 0
    * biases stay f32 (added after f32 accumulation)
    """
    bf = jnp.bfloat16
    h3_dim = params["w3"].shape[1]           # 64
    h3_pad = _round_up(h3_dim, 128)          # 128
    pad3 = h3_pad - h3_dim

    prep = {
        "w1": params["w1"].astype(bf),
        "b1": params["b1"].astype(jnp.float32),
        "w2": params["w2"].astype(bf),
        "b2": params["b2"].astype(jnp.float32),
        "w3": jnp.pad(params["w3"], ((0, 0), (0, pad3))).astype(bf),
        "b3": jnp.pad(params["b3"], ((0, 0), (0, pad3))).astype(jnp.float32),
        "w4": jnp.pad(params["w4"], ((0, pad3), (0, 0))).astype(bf),
        "b4": params["b4"].astype(jnp.float32),
    }
    return jax.tree_util.tree_map(jax.device_put, prep)


def _select_tile(Bp, batch_tile, num_tc):
    """Pick a batch tile (rows per grid step), Bp is already a multiple of 8."""
    max_tile = max(8, _round_up(batch_tile, 8))
    if num_tc <= 1:
        # Single TensorCore: the grid is a serial loop — one big tile, no split.
        return min(Bp, max_tile)
    # Multi-TC (v7x): balanced split so each core carries ~equal rows.
    steps = num_tc * max(1, _cdiv(Bp, num_tc * max_tile))
    return max(8, _round_up(_cdiv(Bp, steps), 8))


@functools.partial(jax.jit, static_argnames=("batch_tile", "num_tc"))
def advanced_dqn_forward(x, prep, *, batch_tile=1024, num_tc=1):
    """x: (B, input_size) float32. prep: output of prepare_params()."""
    w1, b1 = prep["w1"], prep["b1"]
    w2, b2 = prep["w2"], prep["b2"]
    w3, b3 = prep["w3"], prep["b3"]
    w4, b4 = prep["w4"], prep["b4"]
    out_dim = w4.shape[1]

    B, in_dim = x.shape
    # Pad batch to the f32 sublane multiple (8) only; the ragged last tile is
    # handled by Pallas' partial-block read/clipped write. NOTE: stale rows in
    # the padded tail are safe only because every output row depends solely on
    # its own input row (no cross-row reduction) and we slice [:B] below.
    Bp = _round_up(B, 8)
    if Bp != B:
        x = jnp.pad(x, ((0, Bp - B), (0, 0)))

    tile = _select_tile(Bp, batch_tile, num_tc)
    grid = (pl.cdiv(Bp, tile),)

    def row_map(i):
        return (i, 0)

    def whole(i):
        return (0, 0)

    out_p = pl.pallas_call(
        _dqn_kernel,
        out_shape=jax.ShapeDtypeStruct((Bp, out_dim), jnp.float32),
        grid_spec=pl.GridSpec(
            grid=grid,
            in_specs=[
                pl.BlockSpec((tile, in_dim), row_map),   # x tile
                pl.BlockSpec(w1.shape, whole),           # W1 (in, 128)    bf16
                pl.BlockSpec(b1.shape, whole),           # b1 (1, 128)     f32
                pl.BlockSpec(w2.shape, whole),           # W2 (128, 128)   bf16
                pl.BlockSpec(b2.shape, whole),           # b2 (1, 128)     f32
                pl.BlockSpec(w3.shape, whole),           # W3 (128, 128p)  bf16
                pl.BlockSpec(b3.shape, whole),           # b3 (1, 128p)    f32
                pl.BlockSpec(w4.shape, whole),           # W4 (128p, out)  bf16
                pl.BlockSpec(b4.shape, whole),           # b4 (1, out)     f32
            ],
            out_specs=pl.BlockSpec((tile, out_dim), row_map),
        ),
        compiler_params=pltpu.CompilerParams(
            dimension_semantics=("parallel",)),
    )(x, w1, b1, w2, b2, w3, b3, w4, b4)

    return out_p[:B]


def init_params(key, input_size, output_size):
    """Deterministic init matching PyTorch nn.Linear shapes.
    U(-1/sqrt(fan_in), 1/sqrt(fan_in)) like torch's default.
    Weights are stored transposed: (in_features, out_features)."""
    dims = [(input_size, 128), (128, 128), (128, 64), (64, output_size)]
    params = {}
    for idx, (fan_in, fan_out) in enumerate(dims, start=1):
        key, kw, kb = jax.random.split(key, 3)
        bound = 1.0 / jnp.sqrt(jnp.float32(fan_in))
        params[f"w{idx}"] = jax.random.uniform(
            kw, (fan_in, fan_out), jnp.float32, -bound, bound)
        params[f"b{idx}"] = jax.random.uniform(
            kb, (1, fan_out), jnp.float32, -bound, bound)
    return params


def reference_forward_f32(x, params):
    h = jnp.maximum(x @ params["w1"] + params["b1"], 0.0)
    h = jnp.maximum(h @ params["w2"] + params["b2"], 0.0)
    h = jnp.maximum(h @ params["w3"] + params["b3"], 0.0)
    return h @ params["w4"] + params["b4"]


def reference_forward_bf16(x, params):
    """Mirrors the kernel's numerics: bf16 matmul operands, f32 accumulation."""
    bf = jnp.bfloat16

    def lin(a, w, b):
        return jnp.dot(a.astype(bf), w.astype(bf),
                       preferred_element_type=jnp.float32) + b

    h = jnp.maximum(lin(x, params["w1"], params["b1"]), 0.0)
    h = jnp.maximum(lin(h, params["w2"], params["b2"]), 0.0)
    h = jnp.maximum(lin(h, params["w3"], params["b3"]), 0.0)
    return lin(h, params["w4"], params["b4"])


def _check(x, params, prep, out_dim, num_tc):
    out = jax.block_until_ready(advanced_dqn_forward(x, prep, num_tc=num_tc))
    assert out.shape == (x.shape[0], out_dim)
    ref_bf16 = reference_forward_bf16(x, params)
    ref_f32 = reference_forward_f32(x, params)
    assert jnp.allclose(out, ref_bf16, atol=2e-3, rtol=2e-3), "mismatch vs bf16 reference"
    assert jnp.allclose(out, ref_f32, atol=5e-3, rtol=5e-2), "mismatch vs f32 reference"
    return out


if __name__ == "__main__":
    input_size = 8     # small Pong-style state vector
    output_size = 3    # {NOOP, UP, DOWN}

    key = jax.random.PRNGKey(0)
    key, kx1, kx2 = jax.random.split(key, 3)
    params = init_params(key, input_size, output_size)

    # One-time preprocessing (bf16 cast + hidden-layer padding), outside the
    # jitted forward path.
    prep = prepare_params(params)
    num_tc = _num_tensorcores()

    # Small deterministic case (ragged batch: padded to 8 rows, 1 grid step on
    # single-TC chips).
    x_small = jax.random.normal(kx1, (2, input_size), jnp.float32)
    _check(x_small, params, prep, output_size, num_tc)

    # Larger case exercising the multi-tile / balanced-split path
    # (600 rows -> one 600-row step on v5e/v6e, two ~300-row steps on v7x).
    x_big = jax.random.normal(kx2, (600, input_size), jnp.float32)
    _check(x_big, params, prep, output_size, num_tc)

    print("KERNEL_OK")
</pallas_src>

<mosaic_0001>
module attributes {stable_mosaic.version = 11 : i64} {
  func.func @_dqn_kernel(%arg0: i32, %arg1: memref<8x8xf32, #tpu.memory_space<vmem>>, %arg2: memref<8x128xbf16, #tpu.memory_space<vmem>>, %arg3: memref<1x128xf32, #tpu.memory_space<vmem>>, %arg4: memref<128x128xbf16, #tpu.memory_space<vmem>>, %arg5: memref<1x128xf32, #tpu.memory_space<vmem>>, %arg6: memref<128x128xbf16, #tpu.memory_space<vmem>>, %arg7: memref<1x128xf32, #tpu.memory_space<vmem>>, %arg8: memref<128x3xbf16, #tpu.memory_space<vmem>>, %arg9: memref<1x3xf32, #tpu.memory_space<vmem>>, %arg10: memref<8x3xf32, #tpu.memory_space<vmem>>) attributes {dimension_semantics = [#tpu.dimension_semantics<parallel>], iteration_bounds = array<i64: 1>, scalar_prefetch = 0 : i64, scratch_operands = 0 : i64, tpu.core_type = #tpu.core_type<tc>, window_params = [{transform_indices = @transform_0, window_bounds = array<i64: 8, 8>}, {pipeline_mode = #tpu.pipeline_mode<synchronous>, transform_indices = @transform_1, window_bounds = array<i64: 8, 128>}, {pipeline_mode = #tpu.pipeline_mode<synchronous>, transform_indices = @transform_2, window_bounds = array<i64: 1, 128>}, {pipeline_mode = #tpu.pipeline_mode<synchronous>, transform_indices = @transform_3, window_bounds = array<i64: 128, 128>}, {pipeline_mode = #tpu.pipeline_mode<synchronous>, transform_indices = @transform_4, window_bounds = array<i64: 1, 128>}, {pipeline_mode = #tpu.pipeline_mode<synchronous>, transform_indices = @transform_5, window_bounds = array<i64: 128, 128>}, {pipeline_mode = #tpu.pipeline_mode<synchronous>, transform_indices = @transform_6, window_bounds = array<i64: 1, 128>}, {pipeline_mode = #tpu.pipeline_mode<synchronous>, transform_indices = @transform_7, window_bounds = array<i64: 128, 3>}, {pipeline_mode = #tpu.pipeline_mode<synchronous>, transform_indices = @transform_8, window_bounds = array<i64: 1, 3>}, {transform_indices = @transform_9, window_bounds = array<i64: 8, 3>}]} {
    %c0 = arith.constant 0 : index
    %c0_0 = arith.constant 0 : index
    %0 = vector.load %arg1[%c0, %c0_0] : memref<8x8xf32, #tpu.memory_space<vmem>>, vector<8x8xf32>
    %1 = arith.truncf %0 : vector<8x8xf32> to vector<8x8xbf16>
    %c0_1 = arith.constant 0 : index
    %c0_2 = arith.constant 0 : index
    %2 = vector.load %arg2[%c0_1, %c0_2] : memref<8x128xbf16, #tpu.memory_space<vmem>>, vector<8x128xbf16>
    %cst = arith.constant dense<0.000000e+00> : vector<8x128xf32>
    %3 = tpu.matmul %1, %2, %cst {dimension_numbers = #tpu.dot_dimension_numbers<[1], [0], [0], [1], [0, 0, 1, 1], [], []>} : vector<8x8xbf16>, vector<8x128xbf16>, vector<8x128xf32> -> vector<8x128xf32>
    %c0_3 = arith.constant 0 : index
    %c0_4 = arith.constant 0 : index
    %4 = vector.load %arg3[%c0_3, %c0_4] : memref<1x128xf32, #tpu.memory_space<vmem>>, vector<1x128xf32>
    %5 = vector.broadcast %4 : vector<1x128xf32> to vector<8x128xf32>
    %6 = arith.addf %3, %5 : vector<8x128xf32>
    %cst_5 = arith.constant 0.000000e+00 : f32
    %7 = vector.broadcast %cst_5 : f32 to vector<8x128xf32>
    %8 = arith.maximumf %6, %7 : vector<8x128xf32>
    %9 = arith.truncf %8 : vector<8x128xf32> to vector<8x128xbf16>
    %c0_6 = arith.constant 0 : index
    %c0_7 = arith.constant 0 : index
    %10 = vector.load %arg4[%c0_6, %c0_7] : memref<128x128xbf16, #tpu.memory_space<vmem>>, vector<128x128xbf16>
    %cst_8 = arith.constant dense<0.000000e+00> : vector<8x128xf32>
    %11 = tpu.matmul %9, %10, %cst_8 {dimension_numbers = #tpu.dot_dimension_numbers<[1], [0], [0], [1], [0, 0, 1, 1], [], []>} : vector<8x128xbf16>, vector<128x128xbf16>, vector<8x128xf32> -> vector<8x128xf32>
    %c0_9 = arith.constant 0 : index
    %c0_10 = arith.constant 0 : index
    %12 = vector.load %arg5[%c0_9, %c0_10] : memref<1x128xf32, #tpu.memory_space<vmem>>, vector<1x128xf32>
    %13 = vector.broadcast %12 : vector<1x128xf32> to vector<8x128xf32>
    %14 = arith.addf %11, %13 : vector<8x128xf32>
    %cst_11 = arith.constant 0.000000e+00 : f32
    %15 = vector.broadcast %cst_11 : f32 to vector<8x128xf32>
    %16 = arith.maximumf %14, %15 : vector<8x128xf32>
    %17 = arith.truncf %16 : vector<8x128xf32> to vector<8x128xbf16>
    %c0_12 = arith.constant 0 : index
    %c0_13 = arith.constant 0 : index
    %18 = vector.load %arg6[%c0_12, %c0_13] : memref<128x128xbf16, #tpu.memory_space<vmem>>, vector<128x128xbf16>
    %cst_14 = arith.constant dense<0.000000e+00> : vector<8x128xf32>
    %19 = tpu.matmul %17, %18, %cst_14 {dimension_numbers = #tpu.dot_dimension_numbers<[1], [0], [0], [1], [0, 0, 1, 1], [], []>} : vector<8x128xbf16>, vector<128x128xbf16>, vector<8x128xf32> -> vector<8x128xf32>
    %c0_15 = arith.constant 0 : index
    %c0_16 = arith.constant 0 : index
    %20 = vector.load %arg7[%c0_15, %c0_16] : memref<1x128xf32, #tpu.memory_space<vmem>>, vector<1x128xf32>
    %21 = vector.broadcast %20 : vector<1x128xf32> to vector<8x128xf32>
    %22 = arith.addf %19, %21 : vector<8x128xf32>
    %cst_17 = arith.constant 0.000000e+00 : f32
    %23 = vector.broadcast %cst_17 : f32 to vector<8x128xf32>
    %24 = arith.maximumf %22, %23 : vector<8x128xf32>
    %25 = arith.truncf %24 : vector<8x128xf32> to vector<8x128xbf16>
    %c0_18 = arith.constant 0 : index
    %c0_19 = arith.constant 0 : index
    %26 = vector.load %arg8[%c0_18, %c0_19] : memref<128x3xbf16, #tpu.memory_space<vmem>>, vector<128x3xbf16>
    %cst_20 = arith.constant dense<0.000000e+00> : vector<8x3xf32>
    %27 = tpu.matmul %25, %26, %cst_20 {dimension_numbers = #tpu.dot_dimension_numbers<[1], [0], [0], [1], [0, 0, 1, 1], [], []>} : vector<8x128xbf16>, vector<128x3xbf16>, vector<8x3xf32> -> vector<8x3xf32>
    %c0_21 = arith.constant 0 : index
    %c0_22 = arith.constant 0 : index
    %28 = vector.load %arg9[%c0_21, %c0_22] : memref<1x3xf32, #tpu.memory_space<vmem>>, vector<1x3xf32>
    %29 = vector.broadcast %28 : vector<1x3xf32> to vector<8x3xf32>
    %30 = arith.addf %27, %29 : vector<8x3xf32>
    %c0_23 = arith.constant 0 : index
    %c0_24 = arith.constant 0 : index
    %31 = vector.load %arg10[%c0_23, %c0_24] : memref<8x3xf32, #tpu.memory_space<vmem>>, vector<8x3xf32>
    tpu.vector_store %arg10[%c0_23, %c0_24], %30 {strides = array<i32>} : memref<8x3xf32, #tpu.memory_space<vmem>>, vector<8x3xf32>,
    return
  }
  func.func @transform_0(%arg0: i32) -> (i32, i32) {
    %c0_i32 = arith.constant 0 : i32
    %c0_i32_0 = arith.constant 0 : i32
    return %arg0, %c0_i32 : i32, i32
  }
  func.func @transform_1(%arg0: i32) -> (i32, i32) {
    %c0_i32 = arith.constant 0 : i32
    %c0_i32_0 = arith.constant 0 : i32
    %c0_i32_1 = arith.constant 0 : i32
    return %c0_i32, %c0_i32_0 : i32, i32
  }
  func.func @transform_2(%arg0: i32) -> (i32, i32) {
    %c0_i32 = arith.constant 0 : i32
    %c0_i32_0 = arith.constant 0 : i32
    %c0_i32_1 = arith.constant 0 : i32
    return %c0_i32, %c0_i32_0 : i32, i32
  }
  func.func @transform_3(%arg0: i32) -> (i32, i32) {
    %c0_i32 = arith.constant 0 : i32
    %c0_i32_0 = arith.constant 0 : i32
    %c0_i32_1 = arith.constant 0 : i32
    return %c0_i32, %c0_i32_0 : i32, i32
  }
  func.func @transform_4(%arg0: i32) -> (i32, i32) {
    %c0_i32 = arith.constant 0 : i32
    %c0_i32_0 = arith.constant 0 : i32
    %c0_i32_1 = arith.constant 0 : i32
    return %c0_i32, %c0_i32_0 : i32, i32
  }
  func.func @transform_5(%arg0: i32) -> (i32, i32) {
    %c0_i32 = arith.constant 0 : i32
    %c0_i32_0 = arith.constant 0 : i32
    %c0_i32_1 = arith.constant 0 : i32
    return %c0_i32, %c0_i32_0 : i32, i32
  }
  func.func @transform_6(%arg0: i32) -> (i32, i32) {
    %c0_i32 = arith.constant 0 : i32
    %c0_i32_0 = arith.constant 0 : i32
    %c0_i32_1 = arith.constant 0 : i32
    return %c0_i32, %c0_i32_0 : i32, i32
  }
  func.func @transform_7(%arg0: i32) -> (i32, i32) {
    %c0_i32 = arith.constant 0 : i32
    %c0_i32_0 = arith.constant 0 : i32
    %c0_i32_1 = arith.constant 0 : i32
    return %c0_i32, %c0_i32_0 : i32, i32
  }
  func.func @transform_8(%arg0: i32) -> (i32, i32) {
    %c0_i32 = arith.constant 0 : i32
    %c0_i32_0 = arith.constant 0 : i32
    %c0_i32_1 = arith.constant 0 : i32
    return %c0_i32, %c0_i32_0 : i32, i32
  }
  func.func @transform_9(%arg0: i32) -> (i32, i32) {
    %c0_i32 = arith.constant 0 : i32
    %c0_i32_0 = arith.constant 0 : i32
    return %arg0, %c0_i32 : i32, i32
  }
}

</mosaic_0001>

<llo_original>
// kernel: advanced_dqn_forward.1
$region0: #{advanced_dqn_forward.1}
  #allocation0 [shape = 'u32[]', space=smem, size = 0x4, offset = 0x4, fixed_abs, tag = 'smem constant byte address 0x4 - core index']
  #allocation1 [shape = 'u32[72,128]{1,0:T(1,128)}', space=vmem, size = 0x9000, scoped, tag = 'internal scratch']
  %s0 = inlined_call_operand.vmem [shape: f32[8,8], index: 0, kind: input, shape index: {}]
  %s1 = inlined_call_operand.vmem [shape: bf16[8,128], index: 1, kind: input, shape index: {}]
  %s2 = inlined_call_operand.vmem [shape: f32[1,128], index: 2, kind: input, shape index: {}]
  %s3 = inlined_call_operand.vmem [shape: bf16[128,128], index: 3, kind: input, shape index: {}]
  %s4 = inlined_call_operand.vmem [shape: f32[1,128], index: 4, kind: input, shape index: {}]
  %s5 = inlined_call_operand.hbm [shape: bf16[128,128], index: 5, kind: input, shape index: {}]
  %s6 = inlined_call_operand.vmem [shape: f32[1,128], index: 6, kind: input, shape index: {}]
  %s7 = inlined_call_operand.vmem [shape: bf16[128,3], index: 7, kind: input, shape index: {}]
  %s8 = inlined_call_operand.vmem [shape: f32[1,3], index: 8, kind: input, shape index: {}]
  %s9 = inlined_call_operand.vmem [shape: f32[8,3], index: 9, kind: output, shape index: {}]
  %s10 = sld [smem:[#allocation0]]
  $region50: #{advanced_dqn_forward.1} parent=0
    _
  %s12 = ssub.s32 1, %s10
  %s13 = scalar_select 0, %s12, %s10
  $region1: #{advanced_dqn_forward.1} parent=0
    #allocation2 [shape = 'u8[32768]{0}', space=vmem, size = 0x8000, scoped, tag = 'input window, operand 5, single buffered']
    #allocation3 [shape = 's32[1]{0}', space=sflag, size = 0x4, scoped, tag = 'scoped memory for advanced_dqn_forward.1']
    %14 = vsyncpa [#allocation3], 0
    // Predicated region
    $region2: #{advanced_dqn_forward.1} parent=1 // pred_check
      _
    $region3: #{advanced_dqn_forward.1} parent=1 // pred_check_branch
      %16 = sbr.rel (0) target = $region5
    $region4: #{advanced_dqn_forward.1} parent=1 // pred_region
      _
    $region5: #{advanced_dqn_forward.1} parent=1 // pred_fallthru
      _
    // Predicated region
    $region6: #{advanced_dqn_forward.1} parent=1 // pred_check
      _
    $region7: #{advanced_dqn_forward.1} parent=1 // pred_check_branch
      %18 = sbr.rel (0) target = $region9
    $region8: #{advanced_dqn_forward.1} parent=1 // pred_region
      _
    $region9: #{advanced_dqn_forward.1} parent=1 // pred_fallthru
      _
    // Predicated region
    $region10: #{advanced_dqn_forward.1} parent=1 // pred_check
      _
    $region11: #{advanced_dqn_forward.1} parent=1 // pred_check_branch
      %20 = sbr.rel (0) target = $region13
    $region12: #{advanced_dqn_forward.1} parent=1 // pred_region
      _
    $region13: #{advanced_dqn_forward.1} parent=1 // pred_fallthru
      _
    // Predicated region
    $region14: #{advanced_dqn_forward.1} parent=1 // pred_check
      _
    $region15: #{advanced_dqn_forward.1} parent=1 // pred_check_branch
      %22 = sbr.rel (0) target = $region17
    $region16: #{advanced_dqn_forward.1} parent=1 // pred_region
      _
    $region17: #{advanced_dqn_forward.1} parent=1 // pred_fallthru
      _
    // Predicated region
    $region18: #{advanced_dqn_forward.1} parent=1 // pred_check
      _
    $region19: #{advanced_dqn_forward.1} parent=1 // pred_check_branch
      %24 = sbr.rel (0) target = $region21
    $region20: #{advanced_dqn_forward.1} parent=1 // pred_region
      _
    $region21: #{advanced_dqn_forward.1} parent=1 // pred_fallthru
      _
    // Predicated region
    $region22: #{advanced_dqn_forward.1} parent=1 // pred_check
      _
    $region23: #{advanced_dqn_forward.1} parent=1 // pred_check_branch
      %26 = sbr.rel (0) target = $region25
    $region24: #{advanced_dqn_forward.1} parent=1 // pred_region
      %28 = vsyncadd [#allocation3], 0
      %s29 = sshll.u32 %s5, 4
      %s30 = int_to_ptr.hbm [resolvable:$true] %s29
      %s31 = sshll.u32 [#allocation2], 4
      %s32 = int_to_ptr.vmem [resolvable:$true] %s31
      %37 = dma.hbm_to_vmem [thread:$0]  %s30, 1024, %s32, [#allocation3], 64, 64, 4
    $region25: #{advanced_dqn_forward.1} parent=1 // pred_fallthru
      _
    // Predicated region
    $region26: #{advanced_dqn_forward.1} parent=1 // pred_check
      _
    $region27: #{advanced_dqn_forward.1} parent=1 // pred_check_branch
      %39 = sbr.rel (0) target = $region29
    $region28: #{advanced_dqn_forward.1} parent=1 // pred_region
      _
    $region29: #{advanced_dqn_forward.1} parent=1 // pred_fallthru
      _
    // Predicated region
    $region30: #{advanced_dqn_forward.1} parent=1 // pred_check
      _
    $region31: #{advanced_dqn_forward.1} parent=1 // pred_check_branch
      %41 = sbr.rel (0) target = $region33
    $region32: #{advanced_dqn_forward.1} parent=1 // pred_region
      _
    $region33: #{advanced_dqn_forward.1} parent=1 // pred_fallthru
      _
    // Predicated region
    $region34: #{advanced_dqn_forward.1} parent=1 // pred_check
      _
    $region35: #{advanced_dqn_forward.1} parent=1 // pred_check_branch
      %43 = sbr.rel (0) target = $region37
    $region36: #{advanced_dqn_forward.1} parent=1 // pred_region
      _
    $region37: #{advanced_dqn_forward.1} parent=1 // pred_fallthru
      _
    // Predicated region
    $region38: #{advanced_dqn_forward.1} parent=1 // pred_check
      _
    $region39: #{advanced_dqn_forward.1} parent=1 // pred_check_branch
      %45 = sbr.rel (0) target = $region41
    $region40: #{advanced_dqn_forward.1} parent=1 // pred_region
      %47 = dma.done [#allocation3], 1024
    $region41: #{advanced_dqn_forward.1} parent=1 // pred_fallthru
      _
    %v49 = vld [vmem:[%s0] sm:$0xff]
    %v50 = vpack.c.bf16 %v49, %v49
    %v51 = vld [vmem:[%s1] sm:$0xf]
    %v52 = vld [vmem:[%s2] sm:$0x1]
    %v54 = vperm.slane %v52, 0
    %vm56 = vcmask 64512
    %v58 = vsel %vm56, %v50, 0
    %vm60 = vcmask 1043456
    %v62 = vsel %vm60, %v51, 0
    %64 = vmatpush.bf16.msra.mxu0 0
    %65 = vmatpush.bf16.msra.mxu0 0
    %66 = vmatpush.bf16.msra.mxu0 0
    %67 = vmatpush.bf16.msra.mxu0 0
    %68 = vmatpush.bf16.msra.mxu0 0
    %69 = vmatpush.bf16.msra.mxu0 0
    %70 = vmatpush.bf16.msra.mxu0 0
    %71 = vmatpush.bf16.msra.mxu0 %v62
    %72 = vmatmul.bf16.gmra.mxu0 %v58
    %v73 = vpop.f32.mrf.mxu0
    %v74 = vadd.f32 %v54, %v73
    %v75 = vpop.f32.mrf.mxu0
    %76 = vdwg.mxu0
    %v77 = vmax.f32 %v74, 0.0
    %v78 = vpack.c.bf16 %v77, %v77
    %v79 = vld [vmem:[%s3] sm:$0xf]
    %v80 = vld [vmem:[%s3 + $0x4] sm:$0xf]
    %v81 = vld [vmem:[%s3 + $0x8] sm:$0xf]
    %v82 = vld [vmem:[%s3 + $0xc] sm:$0xf]
    %v83 = vld [vmem:[%s3 + $0x10] sm:$0xf]
    %v84 = vld [vmem:[%s3 + $0x14] sm:$0xf]
    %v85 = vld [vmem:[%s3 + $0x18] sm:$0xf]
    %v86 = vld [vmem:[%s3 + $0x1c] sm:$0xf]
    %v87 = vld [vmem:[%s3 + $0x20] sm:$0xf]
    %v88 = vld [vmem:[%s3 + $0x24] sm:$0xf]
    %v89 = vld [vmem:[%s3 + $0x28] sm:$0xf]
    %v90 = vld [vmem:[%s3 + $0x2c] sm:$0xf]
    %v91 = vld [vmem:[%s3 + $0x30] sm:$0xf]
    %v92 = vld [vmem:[%s3 + $0x34] sm:$0xf]
    %v93 = vld [vmem:[%s3 + $0x38] sm:$0xf]
    %v94 = vld [vmem:[%s3 + $0x3c] sm:$0xf]
    %v95 = vld [vmem:[%s4] sm:$0x1]
    %v97 = vperm.slane %v95, 0
    %v115 = vunpack.c.l.b16 %v79
    %v116 = vunpack.c.l.b16 %v80
    %v117 = vunpack.c.l.b16 %v81
    %v118 = vunpack.c.l.b16 %v82
    %v119 = vunpack.c.l.b16 %v83
    %v120 = vunpack.c.l.b16 %v84
    %v121 = vunpack.c.l.b16 %v85
    %v122 = vunpack.c.l.b16 %v86
    %v123 = vunpack.c.l.b16 %v87
    %v124 = vunpack.c.l.b16 %v88
    %v125 = vunpack.c.l.b16 %v89
    %v126 = vunpack.c.l.b16 %v90
    %v127 = vunpack.c.l.b16 %v91
    %v128 = vunpack.c.l.b16 %v92
    %v129 = vunpack.c.l.b16 %v93
    %v130 = vunpack.c.l.b16 %v94
    %v131 = vpack.c.b16 %v116, %v115
    %v132 = vpack.c.b16 %v118, %v117
    %v133 = vpack.c.b16 %v120, %v119
    %v134 = vpack.c.b16 %v122, %v121
    %v135 = vpack.c.b16 %v124, %v123
    %v136 = vpack.c.b16 %v126, %v125
    %v137 = vpack.c.b16 %v128, %v127
    %v138 = vpack.c.b16 %v130, %v129
    %147 = vmatpush.bf16.msra.mxu0 %v138
    %148 = vmatpush.bf16.msra.mxu0 %v137
    %149 = vmatpush.bf16.msra.mxu0 %v136
    %150 = vmatpush.bf16.msra.mxu0 %v135
    %151 = vmatpush.bf16.msra.mxu0 %v134
    %152 = vmatpush.bf16.msra.mxu0 %v133
    %153 = vmatpush.bf16.msra.mxu0 %v132
    %154 = vmatpush.bf16.msra.mxu0 %v131
    %155 = vmatmul.bf16.gmra.mxu0 %v78
    %v156 = vpop.f32.mrf.mxu0
    %v157 = vadd.f32 %v97, %v156
    %v158 = vpop.f32.mrf.mxu0
    %159 = vdwg.mxu0
    %v160 = vmax.f32 %v157, 0.0
    %v161 = vpack.c.bf16 %v160, %v160
    %v162 = vld [vmem:[#allocation2] sm:$0xf]
    %v163 = vld [vmem:[#allocation2 + $0x4] sm:$0xf]
    %v164 = vld [vmem:[#allocation2 + $0x8] sm:$0xf]
    %v165 = vld [vmem:[#allocation2 + $0xc] sm:$0xf]
    %v166 = vld [vmem:[#allocation2 + $0x10] sm:$0xf]
    %v167 = vld [vmem:[#allocation2 + $0x14] sm:$0xf]
    %v168 = vld [vmem:[#allocation2 + $0x18] sm:$0xf]
    %v169 = vld [vmem:[#allocation2 + $0x1c] sm:$0xf]
    %v170 = vld [vmem:[#allocation2 + $0x20] sm:$0xf]
    %v171 = vld [vmem:[#allocation2 + $0x24] sm:$0xf]
    %v172 = vld [vmem:[#allocation2 + $0x28] sm:$0xf]
    %v173 = vld [vmem:[#allocation2 + $0x2c] sm:$0xf]
    %v174 = vld [vmem:[#allocation2 + $0x30] sm:$0xf]
    %v175 = vld [vmem:[#allocation2 + $0x34] sm:$0xf]
    %v176 = vld [vmem:[#allocation2 + $0x38] sm:$0xf]
    %v177 = vld [vmem:[#allocation2 + $0x3c] sm:$0xf]
    %v178 = vld [vmem:[%s6] sm:$0x1]
    %v180 = vperm.slane %v178, 0
    %v198 = vunpack.c.l.b16 %v162
    %v199 = vunpack.c.l.b16 %v163
    %v200 = vunpack.c.l.b16 %v164
    %v201 = vunpack.c.l.b16 %v165
    %v202 = vunpack.c.l.b16 %v166
    %v203 = vunpack.c.l.b16 %v167
    %v204 = vunpack.c.l.b16 %v168
    %v205 = vunpack.c.l.b16 %v169
    %v206 = vunpack.c.l.b16 %v170
    %v207 = vunpack.c.l.b16 %v171
    %v208 = vunpack.c.l.b16 %v172
    %v209 = vunpack.c.l.b16 %v173
    %v210 = vunpack.c.l.b16 %v174
    %v211 = vunpack.c.l.b16 %v175
    %v212 = vunpack.c.l.b16 %v176
    %v213 = vunpack.c.l.b16 %v177
    %v214 = vpack.c.b16 %v199, %v198
    %v215 = vpack.c.b16 %v201, %v200
    %v216 = vpack.c.b16 %v203, %v202
    %v217 = vpack.c.b16 %v205, %v204
    %v218 = vpack.c.b16 %v207, %v206
    %v219 = vpack.c.b16 %v209, %v208
    %v220 = vpack.c.b16 %v211, %v210
    %v221 = vpack.c.b16 %v213, %v212
    %230 = vmatpush.bf16.msra.mxu0 %v221
    %231 = vmatpush.bf16.msra.mxu0 %v220
    %232 = vmatpush.bf16.msra.mxu0 %v219
    %233 = vmatpush.bf16.msra.mxu0 %v218
    %234 = vmatpush.bf16.msra.mxu0 %v217
    %235 = vmatpush.bf16.msra.mxu0 %v216
    %236 = vmatpush.bf16.msra.mxu0 %v215
    %237 = vmatpush.bf16.msra.mxu0 %v214
    %238 = vmatmul.bf16.gmra.mxu0 %v161
    %v239 = vpop.f32.mrf.mxu0
    %v240 = vadd.f32 %v180, %v239
    %v241 = vpop.f32.mrf.mxu0
    %242 = vdwg.mxu0
    %v243 = vmax.f32 %v240, 0.0
    %v244 = vpack.c.bf16 %v243, %v243
    %v245 = vld [vmem:[%s7] sm:$0xf]
    %v246 = vld [vmem:[%s7 + $0x4] sm:$0xf]
    %v247 = vld [vmem:[%s7 + $0x8] sm:$0xf]
    %v248 = vld [vmem:[%s7 + $0xc] sm:$0xf]
    %v249 = vld [vmem:[%s7 + $0x10] sm:$0xf]
    %v250 = vld [vmem:[%s7 + $0x14] sm:$0xf]
    %v251 = vld [vmem:[%s7 + $0x18] sm:$0xf]
    %v252 = vld [vmem:[%s7 + $0x1c] sm:$0xf]
    %v253 = vld [vmem:[%s7 + $0x20] sm:$0xf]
    %v254 = vld [vmem:[%s7 + $0x24] sm:$0xf]
    %v255 = vld [vmem:[%s7 + $0x28] sm:$0xf]
    %v256 = vld [vmem:[%s7 + $0x2c] sm:$0xf]
    %v257 = vld [vmem:[%s7 + $0x30] sm:$0xf]
    %v258 = vld [vmem:[%s7 + $0x34] sm:$0xf]
    %v259 = vld [vmem:[%s7 + $0x38] sm:$0xf]
    %v260 = vld [vmem:[%s7 + $0x3c] sm:$0xf]
    %v261 = vld [vmem:[%s8] sm:$0x1]
    %v263 = vperm.slane %v261, 0
    %v281 = vunpack.c.l.b16 %v245
    %v282 = vunpack.c.l.b16 %v246
    %v283 = vunpack.c.l.b16 %v247
    %v284 = vunpack.c.l.b16 %v248
    %v285 = vunpack.c.l.b16 %v249
    %v286 = vunpack.c.l.b16 %v250
    %v287 = vunpack.c.l.b16 %v251
    %v288 = vunpack.c.l.b16 %v252
    %v289 = vunpack.c.l.b16 %v253
    %v290 = vunpack.c.l.b16 %v254
    %v291 = vunpack.c.l.b16 %v255
    %v292 = vunpack.c.l.b16 %v256
    %v293 = vunpack.c.l.b16 %v257
    %v294 = vunpack.c.l.b16 %v258
    %v295 = vunpack.c.l.b16 %v259
    %v296 = vunpack.c.l.b16 %v260
    %v297 = vpack.c.b16 %v282, %v281
    %v298 = vpack.c.b16 %v284, %v283
    %v299 = vpack.c.b16 %v286, %v285
    %v300 = vpack.c.b16 %v288, %v287
    %v301 = vpack.c.b16 %v290, %v289
    %v302 = vpack.c.b16 %v292, %v291
    %v303 = vpack.c.b16 %v294, %v293
    %v304 = vpack.c.b16 %v296, %v295
    %313 = vmatpush.bf16.msra.mxu0 %v304
    %314 = vmatpush.bf16.msra.mxu0 %v303
    %315 = vmatpush.bf16.msra.mxu0 %v302
    %316 = vmatpush.bf16.msra.mxu0 %v301
    %317 = vmatpush.bf16.msra.mxu0 %v300
    %318 = vmatpush.bf16.msra.mxu0 %v299
    %319 = vmatpush.bf16.msra.mxu0 %v298
    %320 = vmatpush.bf16.msra.mxu0 %v297
    %321 = vmatmul.bf16.gmra.mxu0 %v244
    %v322 = vpop.f32.mrf.mxu0
    %v323 = vadd.f32 %v263, %v322
    %v324 = vpop.f32.mrf.mxu0
    %325 = vdwg.mxu0
    %vm326 = vcmask 23552
    %327 = vst.msk [vmem:[%s9] sm:$0xff] %vm326, %v323
    // Predicated region
    $region42: #{advanced_dqn_forward.1} parent=1 // pred_check
      _
    $region43: #{advanced_dqn_forward.1} parent=1 // pred_check_branch
      %329 = sbr.rel (0) target = $region45
    $region44: #{advanced_dqn_forward.1} parent=1 // pred_region
      _
    $region45: #{advanced_dqn_forward.1} parent=1 // pred_fallthru
      _
    // Predicated region
    $region46: #{advanced_dqn_forward.1} parent=1 // pred_check
      _
    $region47: #{advanced_dqn_forward.1} parent=1 // pred_check_branch
      %331 = sbr.rel (0) target = $region49
    $region48: #{advanced_dqn_forward.1} parent=1 // pred_region
      _
    $region49: #{advanced_dqn_forward.1} parent=1 // pred_fallthru
      _
    %332 = vsyncpa [#allocation3], 1

</llo_original>
